<compile_context>
chip_gen: v5e
topology: v5e:2x2
jax: 0.10.0
libtpu: 0.0.40
codegen_flags: <defaults>
</compile_context>

<pallas_src>
import functools

import jax
import jax.numpy as jnp
from jax import lax
from jax.experimental import pallas as pl
from jax.experimental.pallas import tpu as pltpu


# Sublane packing per element size: f32 -> 8, bf16/f16 -> 16, int8/fp8 -> 32.
_SUBLANE = {4: 8, 2: 16, 1: 32}
# Target input bytes per grid step (amortizes the ~0.35us per-step overhead,
# matters most at v7x's ~3.2 TB/s HBM).
_TARGET_BLOCK_BYTES = 8 * 1024 * 1024


def _round_up(n, m):
    return ((n + m - 1) // m) * m


def _round_down(n, m):
    return (n // m) * m


def _vmem_budget():
    """Per-generation scoped-VMEM limit and in-kernel working-set budget."""
    cap = None
    try:
        cap = getattr(pltpu.get_tpu_info(), "vmem_capacity_bytes", None)
    except Exception:
        cap = None
    if not cap:
        cap = 64 * 1024 * 1024  # conservative default: v7x-sized part
    # 128 MiB parts (v5e/v6e) -> 96 MiB limit / 80 MiB budget; 64 MiB (v7x) -> 48 / 40.
    limit = min((int(cap) * 3) // 4, 100 * 1024 * 1024)
    budget = (limit * 5) // 6  # headroom for g, semaphores, compiler scratch
    return budget, limit


# ----------------------------------------------------------------------------
# Single-pass kernel (full dim fits in one block): one HBM read + one write.
# ----------------------------------------------------------------------------
def _rmsnorm_kernel(x_ref, g_ref, o_ref, *, scale, eps, approx_recip, native_rescale):
    # x_ref: (tile_rows, dim), g_ref: (1, dim), o_ref: (tile_rows, dim)
    xf = x_ref[...].astype(jnp.float32)
    sumsq = jnp.sum(xf * xf, axis=-1, keepdims=True)          # f32 accumulation
    norm = jnp.maximum(jnp.sqrt(sumsq) * scale, eps)
    inv = pl.reciprocal(norm, approx=approx_recip)             # EUP when approx
    if native_rescale:
        # Sub-f32 path: cast the per-row scale once; rescale math in native dtype.
        o_ref[...] = (x_ref[...] * inv.astype(x_ref.dtype) * g_ref[...]).astype(o_ref.dtype)
    else:
        o_ref[...] = (xf * inv * g_ref[...].astype(jnp.float32)).astype(o_ref.dtype)


# ----------------------------------------------------------------------------
# Two-pass fallback for very wide dims (lane-chunked): pass 1 computes per-row
# 1/clamp(norm), pass 2 applies it. ~1.5x HBM traffic, but works for any dim.
# ----------------------------------------------------------------------------
def _sumsq_inv_kernel(x_ref, inv_ref, acc_ref, *, scale, eps, dim, td):
    k = pl.program_id(1)

    @pl.when(k == 0)
    def _():
        acc_ref[...] = jnp.zeros_like(acc_ref)

    x = x_ref[...].astype(jnp.float32)
    # Mask lanes past the true dim (partial last lane-chunk block may hold garbage).
    col = k * td + lax.broadcasted_iota(jnp.int32, x.shape, 1)
    x = jnp.where(col < dim, x, 0.0)
    acc_ref[...] += jnp.sum(x * x, axis=-1, keepdims=True)

    @pl.when(k == pl.num_programs(1) - 1)
    def _():
        norm = jnp.maximum(jnp.sqrt(acc_ref[...]) * scale, eps)
        inv_ref[...] = pl.reciprocal(norm, approx=False)


def _apply_kernel(x_ref, inv_ref, g_ref, o_ref):
    o_ref[...] = (
        x_ref[...].astype(jnp.float32) * inv_ref[...] * g_ref[...].astype(jnp.float32)
    ).astype(o_ref.dtype)


def _rmsnorm_two_pass(x2d, g2d, *, scale, eps, tr, td, vmem_limit):
    rows, dim = x2d.shape
    grid = (pl.cdiv(rows, tr), pl.cdiv(dim, td))

    inv = pl.pallas_call(
        functools.partial(_sumsq_inv_kernel, scale=scale, eps=eps, dim=dim, td=td),
        out_shape=jax.ShapeDtypeStruct((rows, 1), jnp.float32),
        grid_spec=pltpu.PrefetchScalarGridSpec(
            num_scalar_prefetch=0,
            grid=grid,
            in_specs=[pl.BlockSpec((tr, td), lambda i, k: (i, k))],
            out_specs=pl.BlockSpec((tr, 1), lambda i, k: (i, 0)),
            scratch_shapes=[pltpu.VMEM((tr, 1), jnp.float32)],
        ),
        compiler_params=pltpu.CompilerParams(
            dimension_semantics=("parallel", "arbitrary"),
            vmem_limit_bytes=vmem_limit,
        ),
    )(x2d)

    out = pl.pallas_call(
        _apply_kernel,
        out_shape=jax.ShapeDtypeStruct((rows, dim), x2d.dtype),
        grid_spec=pltpu.PrefetchScalarGridSpec(
            num_scalar_prefetch=0,
            grid=grid,
            in_specs=[
                pl.BlockSpec((tr, td), lambda i, k: (i, k)),
                pl.BlockSpec((tr, 1), lambda i, k: (i, 0)),
                pl.BlockSpec((1, td), lambda i, k: (0, k)),
            ],
            out_specs=pl.BlockSpec((tr, td), lambda i, k: (i, k)),
        ),
        compiler_params=pltpu.CompilerParams(
            dimension_semantics=("parallel", "parallel"),
            vmem_limit_bytes=vmem_limit,
        ),
    )(x2d, inv, g2d)
    return out


# ----------------------------------------------------------------------------
# Wrapper
# ----------------------------------------------------------------------------
def rmsnorm(x, g, eps=1e-8, tile_rows=None):
    """x: (..., dim), g: (dim,). Same forward semantics as the PyTorch module."""
    dim = x.shape[-1]
    scale = float(dim) ** (-0.5)
    orig_shape = x.shape
    dtype = x.dtype
    itemsize = jnp.dtype(dtype).itemsize
    sublane = _SUBLANE.get(itemsize, 8)

    x2d = x.reshape(-1, dim)  # contiguous flatten: free view, no extra HBM pass
    rows = x2d.shape[0]
    g2d = g.reshape(1, dim)

    budget, vmem_limit = _vmem_budget()

    native_rescale = jnp.dtype(dtype) != jnp.dtype(jnp.float32)
    # Per-element VMEM: double-buffered in+out pipeline blocks (2*2*itemsize) plus
    # in-kernel temporaries (f32 upcast only on the native path, upcast+product on f32).
    temp_bytes = 4 if native_rescale else 8
    bytes_per_row = dim * (4 * itemsize + temp_bytes)
    max_tr_vmem = budget // bytes_per_row

    if max_tr_vmem < sublane:
        # Full-dim block doesn't fit even at minimum tile height: lane-chunked two-pass.
        tr_fb = max(sublane, _round_down(min(256, _round_up(rows, sublane)), sublane))
        td_fb = max(128, _round_down(budget // (tr_fb * (4 * itemsize + 8)), 128))
        out = _rmsnorm_two_pass(
            x2d, g2d, scale=scale, eps=eps, tr=tr_fb, td=td_fb, vmem_limit=vmem_limit
        )
        return out.reshape(orig_shape)

    # --- row-tile selection (bandwidth-bound: biggest tile that fits, but keep
    # --- >= 2 grid steps so v7x's two TensorCores both get work) --------------
    if tile_rows is None:
        tr = max(sublane, _TARGET_BLOCK_BYTES // max(1, dim * itemsize))
    else:
        tr = max(sublane, int(tile_rows))
    tr = min(tr, max_tr_vmem, _round_up(rows, sublane))
    if rows > sublane:
        tr = min(tr, _round_up(-(-rows // 2), sublane))
    tr = max(sublane, _round_down(tr, sublane))

    # Exact divide for f32/f16 parity; approx (EUP) reciprocal for bf16 / 8-bit.
    approx_recip = (jnp.dtype(dtype) == jnp.dtype(jnp.bfloat16)) or itemsize == 1

    kernel = functools.partial(
        _rmsnorm_kernel,
        scale=scale,
        eps=eps,
        approx_recip=approx_recip,
        native_rescale=native_rescale,
    )

    out = pl.pallas_call(
        kernel,
        out_shape=jax.ShapeDtypeStruct((rows, dim), dtype),
        grid_spec=pltpu.PrefetchScalarGridSpec(
            num_scalar_prefetch=0,
            grid=(pl.cdiv(rows, tr),),
            in_specs=[
                pl.BlockSpec((tr, dim), lambda i: (i, 0)),
                pl.BlockSpec((1, dim), lambda i: (0, 0)),
            ],
            out_specs=pl.BlockSpec((tr, dim), lambda i: (i, 0)),
        ),
        compiler_params=pltpu.CompilerParams(
            # Shards the row axis across both TensorCores on v7x; no-op on v5e/v6e.
            dimension_semantics=("parallel",),
            vmem_limit_bytes=vmem_limit,
        ),
    )(x2d, g2d)

    return out.reshape(orig_shape)


def _reference(x, g, eps=1e-8):
    dim = x.shape[-1]
    xf = x.astype(jnp.float32)
    norm = jnp.linalg.norm(xf, axis=-1, keepdims=True) * (dim ** -0.5)
    return (xf / jnp.maximum(norm, eps) * g.astype(jnp.float32)).astype(x.dtype)


if __name__ == "__main__":
    key = jax.random.PRNGKey(0)
    k1, k2, k3, k4 = jax.random.split(key, 4)

    # Small shapes consistent with the module: batch=2, seq=8, hidden=32.
    B, S, D = 2, 8, 32
    x = jax.random.normal(k1, (B, S, D), dtype=jnp.float32)
    g = jnp.ones((D,), dtype=jnp.float32)  # nn.Parameter(torch.ones(dim))

    out = jax.block_until_ready(rmsnorm(x, g))
    ref = _reference(x, g)
    assert out.shape == x.shape and out.dtype == x.dtype
    assert jnp.allclose(out, ref, atol=1e-5, rtol=1e-5), "f32 mismatch vs reference"

    # Ragged row count (15 rows, not a tile multiple) -> Pallas partial last block
    # (no pad/slice), plus the native-dtype / approx-reciprocal bf16 path.
    xb = jax.random.normal(k2, (3, 5, D), dtype=jnp.bfloat16)
    gb = jnp.ones((D,), dtype=jnp.bfloat16)
    outb = jax.block_until_ready(rmsnorm(xb, gb))
    refb = _reference(xb, gb)
    assert outb.shape == xb.shape and outb.dtype == xb.dtype
    assert jnp.allclose(
        outb.astype(jnp.float32), refb.astype(jnp.float32), atol=2e-2, rtol=2e-2
    ), "bf16 mismatch vs reference"

    # Exercise the wide-dim lane-chunked fallback kernels directly with forced
    # small tiles (partial row block, partial lane block, lane masking).
    xw = jax.random.normal(k3, (28, 320), dtype=jnp.float32)
    gw = jax.random.normal(k4, (320,), dtype=jnp.float32) * 0.1 + 1.0
    _, _lim = _vmem_budget()
    outw = jax.block_until_ready(
        _rmsnorm_two_pass(
            xw, gw.reshape(1, -1), scale=320 ** -0.5, eps=1e-8, tr=8, td=128, vmem_limit=_lim
        )
    )
    refw = _reference(xw, gw)
    assert jnp.allclose(outw, refw, atol=1e-5, rtol=1e-5), "two-pass mismatch vs reference"

    print("KERNEL_OK")
</pallas_src>

<mosaic_0001>
module attributes {stable_mosaic.version = 11 : i64} {
  func.func @_rmsnorm_kernel(%arg0: i32, %arg1: memref<8x32xf32, #tpu.memory_space<vmem>>, %arg2: memref<1x32xf32, #tpu.memory_space<vmem>>, %arg3: memref<8x32xf32, #tpu.memory_space<vmem>>) attributes {dimension_semantics = [#tpu.dimension_semantics<parallel>], iteration_bounds = array<i64: 2>, scalar_prefetch = 0 : i64, scratch_operands = 0 : i64, tpu.core_type = #tpu.core_type<tc>, window_params = [{transform_indices = @transform_0, window_bounds = array<i64: 8, 32>}, {pipeline_mode = #tpu.pipeline_mode<synchronous>, transform_indices = @transform_1, window_bounds = array<i64: 1, 32>}, {transform_indices = @transform_2, window_bounds = array<i64: 8, 32>}]} {
    %c0 = arith.constant 0 : index
    %c0_0 = arith.constant 0 : index
    %0 = vector.load %arg1[%c0, %c0_0] : memref<8x32xf32, #tpu.memory_space<vmem>>, vector<8x32xf32>
    %1 = arith.mulf %0, %0 : vector<8x32xf32>
    %cst = arith.constant dense<0.000000e+00> : vector<8xf32>
    %2 = vector.multi_reduction <add>, %1, %cst [1] : vector<8x32xf32> to vector<8xf32>
    %3 = vector.shape_cast %2 : vector<8xf32> to vector<8x1xf32>
    %4 = math.sqrt %3 : vector<8x1xf32>
    %cst_1 = arith.constant 0.176776692 : f32
    %5 = vector.broadcast %cst_1 : f32 to vector<8x1xf32>
    %6 = arith.mulf %4, %5 : vector<8x1xf32>
    %cst_2 = arith.constant 9.99999993E-9 : f32
    %7 = vector.broadcast %cst_2 : f32 to vector<8x1xf32>
    %8 = arith.maximumf %6, %7 : vector<8x1xf32>
    %9 = tpu.reciprocal %8 : vector<8x1xf32> -> vector<8x1xf32>
    %10 = vector.broadcast %9 : vector<8x1xf32> to vector<8x32xf32>
    %11 = arith.mulf %0, %10 : vector<8x32xf32>
    %c0_3 = arith.constant 0 : index
    %c0_4 = arith.constant 0 : index
    %12 = vector.load %arg2[%c0_3, %c0_4] : memref<1x32xf32, #tpu.memory_space<vmem>>, vector<1x32xf32>
    %13 = vector.broadcast %12 : vector<1x32xf32> to vector<8x32xf32>
    %14 = arith.mulf %11, %13 : vector<8x32xf32>
    %c0_5 = arith.constant 0 : index
    %c0_6 = arith.constant 0 : index
    %15 = vector.load %arg3[%c0_5, %c0_6] : memref<8x32xf32, #tpu.memory_space<vmem>>, vector<8x32xf32>
    tpu.vector_store %arg3[%c0_5, %c0_6], %14 {strides = array<i32>} : memref<8x32xf32, #tpu.memory_space<vmem>>, vector<8x32xf32>,
    return
  }
  func.func @transform_0(%arg0: i32) -> (i32, i32) {
    %c0_i32 = arith.constant 0 : i32
    %c0_i32_0 = arith.constant 0 : i32
    return %arg0, %c0_i32 : i32, i32
  }
  func.func @transform_1(%arg0: i32) -> (i32, i32) {
    %c0_i32 = arith.constant 0 : i32
    %c0_i32_0 = arith.constant 0 : i32
    %c0_i32_1 = arith.constant 0 : i32
    return %c0_i32, %c0_i32_0 : i32, i32
  }
  func.func @transform_2(%arg0: i32) -> (i32, i32) {
    %c0_i32 = arith.constant 0 : i32
    %c0_i32_0 = arith.constant 0 : i32
    return %arg0, %c0_i32 : i32, i32
  }
}

</mosaic_0001>

<llo_original>
// kernel: tpu_custom_call.1
$region0: #{tpu_custom_call.1}
  #allocation0 [shape = 'u32[]', space=smem, size = 0x4, offset = 0x4, fixed_abs, tag = 'smem constant byte address 0x4 - core index']
  #allocation1 [shape = 'u32[72,128]{1,0:T(1,128)}', space=vmem, size = 0x9000, scoped, tag = 'internal scratch']
  %s0 = inlined_call_operand.hbm [shape: f32[16,32], index: 0, kind: input, shape index: {}]
  %s1 = inlined_call_operand.hbm [shape: f32[1,32], index: 1, kind: input, shape index: {}]
  %s2 = inlined_call_operand.hbm [shape: f32[16,32], index: 2, kind: output, shape index: {}]
  %s3 = sld [smem:[#allocation0]]
  $region49: #{tpu_custom_call.1} parent=0
    _
  %s5 = ssub.s32 1, %s3
  %s6 = scalar_select 0, %s5, %s3
  $region1: #{tpu_custom_call.1} parent=0
    #allocation2 [shape = 'u8[8192]{0}', space=vmem, size = 0x2000, scoped, tag = 'input window, operand 0']
    #allocation3 [shape = 's32[2]{0}', space=sflag, size = 0x8, scoped, tag = 'scoped memory for tpu_custom_call.1']
    #allocation4 [shape = 's32[2]{0}', space=sflag, size = 0x8, scoped, tag = 'scoped memory for tpu_custom_call.1']
    #allocation5 [shape = 'u8[512]{0}', space=vmem, size = 0x400, scoped, tag = 'input window, operand 1, single buffered']
    #allocation6 [shape = 's32[1]{0}', space=sflag, size = 0x4, scoped, tag = 'scoped memory for tpu_custom_call.1']
    #allocation7 [shape = 'u8[8192]{0}', space=vmem, size = 0x2000, scoped, tag = 'output window, operand 0']
    %7 = vsyncpa [#allocation3], 0
    %s8 = scalar_lea.sflag [#allocation3], 1
    %9 = vsyncpa %s8, 0
    %10 = vsyncpa [#allocation6], 0
    %11 = vsyncpa [#allocation4], 0
    %s12 = scalar_lea.sflag [#allocation4], 1
    %13 = vsyncpa %s12, 0
    loop: start=0, step=1, limit=4
    $region2: #{tpu_custom_call.1} parent=1 // loop_pre_header
      _
    $region3: #{tpu_custom_call.1} parent=1 // loop_header
      %s15 = sphi 0, %s19
      %p16 = scmp.ge.s32.totalorder %s15, 4
      %s25 = sphi 0, %s27
      %s28 = sphi 0, %s25
      %s29 = sphi 0, %s28
      %s45 = sphi 0, %s29
      %s49 = sphi 0, %s49
      %s51 = sphi 0, %s49
      %s52 = sphi 0, %s51
      %s66 = sphi 0, %s52
      %s72 = sphi 0, %s74
      %s75 = sphi 0, %s72
      %s76 = sphi 0, %s75
      %s92 = sphi 0, %s76
    $region4: #{tpu_custom_call.1} parent=1 // loop_header_branch
      %18 = sbr.rel (%p16) target = $region8
    $region5: #{tpu_custom_call.1} parent=1 // loop_body
      %s20 = ssub.s32 %s15, 1
      %s21 = ssub.s32 %s15, 2
      %s22 = sadd.s32 %s15, 1
      %s23 = ssub.s32 %s15, %s22
      %p24 = scmp.eq.s32.totalorder %s23, 0
      %s26 = sadd.s32 %s25, 1
      %s27 = scalar_select %p24, %s25, %s26
      %p30 = pneg %p24
      %p31 = scmp.eq.s32.totalorder %s15, 1
      %p32 = por %p30, %p31
      %p33 = scmp.ne.s32.totalorder %s25, %s28
      %p34 = scmp.eq.s32.totalorder %s15, 0
      %p35 = por %p33, %p34
      %p36 = scmp.ne.s32.totalorder %s25, %s28
      %p37 = scmp.eq.s32.totalorder %s20, 1
      %p38 = por %p36, %p37
      %p39 = scmp.ne.s32.totalorder %s28, %s29
      %p40 = scmp.eq.s32.totalorder %s20, 0
      %p41 = por %p39, %p40
      %p42 = scmp.ne.s32.totalorder %s28, %s29
      %p43 = scmp.eq.s32.totalorder %s21, 1
      %p44 = por %p42, %p43
      %p46 = scmp.ne.s32.totalorder %s29, %s45
      %p47 = scmp.eq.s32.totalorder %s21, 0
      %p48 = por %p46, %p47
      %s50 = sadd.s32 %s49, 1
      %p53 = scmp.eq.s32.totalorder %s15, 1
      %p54 = scmp.ne.s32.totalorder %s49, %s51
      %p55 = scmp.eq.s32.totalorder %s15, 0
      %p56 = por %p54, %p55
      %p57 = scmp.ne.s32.totalorder %s49, %s51
      %p58 = scmp.eq.s32.totalorder %s20, 1
      %p59 = por %p57, %p58
      %p60 = scmp.ne.s32.totalorder %s51, %s52
      %p61 = scmp.eq.s32.totalorder %s20, 0
      %p62 = por %p60, %p61
      %p63 = scmp.ne.s32.totalorder %s51, %s52
      %p64 = scmp.eq.s32.totalorder %s21, 1
      %p65 = por %p63, %p64
      %p67 = scmp.ne.s32.totalorder %s52, %s66
      %p68 = scmp.eq.s32.totalorder %s21, 0
      %p69 = por %p67, %p68
      %s70 = ssub.s32 %s15, %s22
      %p71 = scmp.eq.s32.totalorder %s70, 0
      %s73 = sadd.s32 %s72, 1
      %s74 = scalar_select %p71, %s72, %s73
      %p77 = pneg %p71
      %p78 = scmp.eq.s32.totalorder %s15, 1
      %p79 = por %p77, %p78
      %p80 = scmp.ne.s32.totalorder %s72, %s75
      %p81 = scmp.eq.s32.totalorder %s15, 0
      %p82 = por %p80, %p81
      %p83 = scmp.ne.s32.totalorder %s72, %s75
      %p84 = scmp.eq.s32.totalorder %s20, 1
      %p85 = por %p83, %p84
      %p86 = scmp.ne.s32.totalorder %s75, %s76
      %p87 = scmp.eq.s32.totalorder %s20, 0
      %p88 = por %p86, %p87
      %p89 = scmp.ne.s32.totalorder %s75, %s76
      %p90 = scmp.eq.s32.totalorder %s21, 1
      %p91 = por %p89, %p90
      %p93 = scmp.ne.s32.totalorder %s76, %s92
      %p94 = scmp.eq.s32.totalorder %s21, 0
      %p95 = por %p93, %p94
      %p96 = scmp.le.s32.totalorder 1, %s15
      %p97 = scmp.lt.s32.totalorder %s15, 3
      %p98 = pnand %p96, %p97
      %p99 = pneg %p98
      // Predicated region
      $region9: #{tpu_custom_call.1} parent=5 // pred_check
        _
      $region10: #{tpu_custom_call.1} parent=5 // pred_check_branch
        %101 = sbr.rel (%p98) target = $region12
      $region11: #{tpu_custom_call.1} parent=5 // pred_region
        %s102 = ssub.s32 %s15, 1
        // Predicated region
        $region13: #{tpu_custom_call.1} parent=11 // pred_check
          %p103 = pneg %p62
        $region14: #{tpu_custom_call.1} parent=11 // pred_check_branch
          %105 = sbr.rel (%p103) target = $region16
        $region15: #{tpu_custom_call.1} parent=11 // pred_region
          %107 = vsyncadd [#allocation6], 0
          %s109 = sshll.u32 %s1, 4
          %s110 = int_to_ptr.hbm [resolvable:$true] %s109
          %s111 = sshll.u32 [#allocation5], 4
          %s112 = int_to_ptr.vmem [resolvable:$true] %s111
          %114 = dma.hbm_to_vmem [thread:$0]  %s110, 16, %s112, [#allocation6]
        $region16: #{tpu_custom_call.1} parent=11 // pred_fallthru
          _
      $region12: #{tpu_custom_call.1} parent=5 // pred_fallthru
        _
      %p115 = scmp.lt.s32.totalorder %s15, 2
      // Predicated region
      $region17: #{tpu_custom_call.1} parent=5 // pred_check
        %p116 = pneg %p115
      $region18: #{tpu_custom_call.1} parent=5 // pred_check_branch
        %118 = sbr.rel (%p116) target = $region20
      $region19: #{tpu_custom_call.1} parent=5 // pred_region
        // Predicated region
        $region21: #{tpu_custom_call.1} parent=19 // pred_check
          %p119 = pneg %p35
        $region22: #{tpu_custom_call.1} parent=19 // pred_check_branch
          %121 = sbr.rel (%p119) target = $region24
        $region23: #{tpu_custom_call.1} parent=19 // pred_region
          %s122 = sand.u32 %s25, 1
          %s123 = scalar_lea.sflag [#allocation3], %s122
          %s124 = sand.u32 %s25, 1
          %s125 = smul.addr %s124, 8
          %s126 = scalar_lea.vmem [#allocation2], %s125
          %128 = vsyncadd %s123, 0
          %s129 = smul.addr %s15, 8
          %s130 = scalar_lea.hbm %s0, %s129
          %s132 = sshll.u32 %s130, 4
          %s133 = int_to_ptr.hbm [resolvable:$true] %s132
          %s134 = sshll.u32 %s126, 4
          %s135 = int_to_ptr.vmem [resolvable:$true] %s134
          %137 = dma.hbm_to_vmem [thread:$0]  %s133, 128, %s135, %s123
        $region24: #{tpu_custom_call.1} parent=19 // pred_fallthru
          _
      $region20: #{tpu_custom_call.1} parent=5 // pred_fallthru
        _
      %p138 = scmp.le.s32.totalorder 1, %s15
      %p139 = scmp.lt.s32.totalorder %s15, 3
      %p140 = pnand %p138, %p139
      %p141 = pneg %p140
      // Predicated region
      $region25: #{tpu_custom_call.1} parent=5 // pred_check
        _
      $region26: #{tpu_custom_call.1} parent=5 // pred_check_branch
        %143 = sbr.rel (%p140) target = $region28
      $region27: #{tpu_custom_call.1} parent=5 // pred_region
        %s144 = ssub.s32 %s15, 1
        %s145 = sand.u32 %s28, 1
        %s146 = scalar_lea.sflag [#allocation3], %s145
        %s147 = sand.u32 %s28, 1
        %s148 = smul.addr %s147, 8
        %s149 = scalar_lea.vmem [#allocation2], %s148
        // Predicated region
        $region29: #{tpu_custom_call.1} parent=27 // pred_check
          %p150 = pneg %p41
        $region30: #{tpu_custom_call.1} parent=27 // pred_check_branch
          %152 = sbr.rel (%p150) target = $region32
        $region31: #{tpu_custom_call.1} parent=27 // pred_region
          %154 = dma.done %s146, 128
        $region32: #{tpu_custom_call.1} parent=27 // pred_fallthru
          _
        // Predicated region
        $region33: #{tpu_custom_call.1} parent=27 // pred_check
          %p155 = pneg %p62
        $region34: #{tpu_custom_call.1} parent=27 // pred_check_branch
          %157 = sbr.rel (%p155) target = $region36
        $region35: #{tpu_custom_call.1} parent=27 // pred_region
          %159 = dma.done [#allocation6], 16
        $region36: #{tpu_custom_call.1} parent=27 // pred_fallthru
          _
        %s160 = sand.u32 %s28, 1
        %s161 = scalar_lea.sflag [#allocation3], %s160
        %s162 = sand.u32 %s28, 1
        %s163 = smul.addr %s162, 8
        %s164 = scalar_lea.vmem [#allocation2], %s163
        %p165 = pneg %p41
        %p166 = pneg %p38
        %p167 = pneg %p62
        %p168 = pneg %p59
        %p169 = pneg %p88
        %p170 = pneg %p85
        %s171 = sand.u32 %s75, 1
        %s172 = scalar_lea.sflag [#allocation4], %s171
        %s173 = sand.u32 %s75, 1
        %s174 = smul.addr %s173, 8
        %s175 = scalar_lea.vmem [#allocation7], %s174
        %v176 = vld [vmem:[%s149] sm:$0xff]
        %v177 = vmul.f32 %v176, %v176
        %vm178 = vcmask 261120
        %v179 = vsel %vm178, %v177, 0.0
        %180 = vadd.xlane.f32.xlu0 %v179
        %v181 = vpop.xlane.xlu0 %180
        %v182 = vrsqrt.pop %v181
        %v183 = vmul.f32 %v182, %v181
        %v184 = vmul.f32 %v183, %v182
        %v185 = vmul.f32 0.5, %v184
        %v186 = vsub.f32 1.5, %v185
        %v187 = vmul.f32 %v182, %v186
        %v188 = vmul.f32 %v181, %v187
        %vm189 = vcmp.eq.f32.partialorder %v181, inf
        %v190 = vsel %vm189, %v181, %v188
        %vm191 = vcmp.eq.f32.partialorder %v181, 0.0
        %v192 = vand.u32 %v181, 2147483648
        %v193 = vsel %vm191, %v192, %v190
        %v194 = vmul.f32 %v193, 0.17677669
        %v195 = vmax.f32 %v194, 1e-08
        %v196 = vrcp.pop %v195
        %v197 = vmul.f32 %v195, %v196
        %v198 = vsub.f32 1.0, %v197
        %v199 = vmul.f32 %v196, %v198
        %v200 = vadd.f32 %v196, %v199
        %vm201 = vweird.f32 %v195
        %vm202 = vweird.f32 %v196
        %vm203 = vmor %vm201, %vm202
        %v204 = vsel %vm203, %v196, %v200
        %v205 = vand.u32 2147483647, %v195
        %vm206 = vcmp.eq.f32.partialorder %v205, 8.507059e+37
        %v207 = vand.u32 %v195, 2147483648
        %v208 = vor.u32 1.1754944e-38, %v207
        %v209 = vsel %vm206, %v208, %v204
        %v210 = vmul.f32 %v176, %v209
        %v211 = vld [vmem:[#allocation5] sm:$0x1]
        %v213 = vperm.slane %v211, 0
        %v215 = vmul.f32 %v210, %v213
        %216 = vst.msk [vmem:[%s175] sm:$0xff] %vm178, %v215
        %s217 = sand.u32 %s75, 1
        %s218 = scalar_lea.sflag [#allocation4], %s217
        %s219 = sand.u32 %s75, 1
        %s220 = smul.addr %s219, 8
        %s221 = scalar_lea.vmem [#allocation7], %s220
        // Predicated region
        $region37: #{tpu_custom_call.1} parent=27 // pred_check
          %p222 = pneg %p85
        $region38: #{tpu_custom_call.1} parent=27 // pred_check_branch
          %224 = sbr.rel (%p222) target = $region40
        $region39: #{tpu_custom_call.1} parent=27 // pred_region
          %226 = vsyncadd %s218, 0
          %s227 = smul.addr %s20, 8
          %s228 = scalar_lea.hbm %s2, %s227
          %s230 = sshll.u32 %s221, 4
          %s231 = int_to_ptr.vmem [resolvable:$true] %s230
          %s232 = sshll.u32 %s228, 4
          %s233 = int_to_ptr.hbm [resolvable:$true] %s232
          %235 = dma.vmem_to_hbm [thread:$0]  %s231, 128, %s233, %s218
        $region40: #{tpu_custom_call.1} parent=27 // pred_fallthru
          _
      $region28: #{tpu_custom_call.1} parent=5 // pred_fallthru
        _
      %p236 = scmp.le.s32.totalorder 2, %s15
      // Predicated region
      $region41: #{tpu_custom_call.1} parent=5 // pred_check
        %p237 = pneg %p236
      $region42: #{tpu_custom_call.1} parent=5 // pred_check_branch
        %239 = sbr.rel (%p237) target = $region44
      $region43: #{tpu_custom_call.1} parent=5 // pred_region
        %s240 = ssub.s32 %s15, 2
        // Predicated region
        $region45: #{tpu_custom_call.1} parent=43 // pred_check
          %p241 = pneg %p91
        $region46: #{tpu_custom_call.1} parent=43 // pred_check_branch
          %243 = sbr.rel (%p241) target = $region48
        $region47: #{tpu_custom_call.1} parent=43 // pred_region
          %s244 = sand.u32 %s76, 1
          %s245 = scalar_lea.sflag [#allocation4], %s244
          %s246 = sand.u32 %s76, 1
          %s247 = smul.addr %s246, 8
          %s248 = scalar_lea.vmem [#allocation7], %s247
          %250 = dma.done %s245, 128
        $region48: #{tpu_custom_call.1} parent=43 // pred_fallthru
          _
      $region44: #{tpu_custom_call.1} parent=5 // pred_fallthru
        _
    $region6: #{tpu_custom_call.1} parent=1 // loop_footer
      %s19 = sadd.s32 1, %s15
    $region7: #{tpu_custom_call.1} parent=1 // loop_footer_branch
      %14 = sbr.rel target = $region3
    $region8: #{tpu_custom_call.1} parent=1 // loop_exit
      _
    %251 = vsyncpa [#allocation3], 1
    %s252 = scalar_lea.sflag [#allocation3], 1
    %253 = vsyncpa %s252, 1
    %254 = vsyncpa [#allocation6], 1
    %255 = vsyncpa [#allocation4], 1
    %s256 = scalar_lea.sflag [#allocation4], 1
    %257 = vsyncpa %s256, 1

</llo_original>
